<compile_context>
chip_gen: v7x
topology: tpu7x:2x2x1
jax: 0.10.0
libtpu: 0.0.40
codegen_flags: <defaults>
</compile_context>

<pallas_src>
import functools

import jax
import jax.numpy as jnp
from jax import lax
from jax.experimental import pallas as pl
from jax.experimental.pallas import tpu as pltpu


def _round_up(x: int, m: int) -> int:
    return (x + m - 1) // m * m


def _vmem_limit_bytes() -> int:
    """Per-generation VMEM budget: v2-v6 have 128 MiB physical VMEM -> ~100 MiB;
    anything else (v7x: 64 MiB physical) stays at a conservative 48 MiB."""
    try:
        kind = jax.devices()[0].device_kind.lower()
    except Exception:
        kind = ""
    if any(v in kind for v in ("v2", "v3", "v4", "v5", "v6")):
        return 100 * 1024 * 1024
    return 48 * 1024 * 1024


# ----------------------------- Pallas kernel -----------------------------

def _patch_proj_kernel(p_ref, w_ref, b_ref, o_ref):
    # p_ref: (TM, K) bf16 | w_ref: (K, TD) bf16 | b_ref: (1, TD) f32
    # o_ref: (TM, TD) f32 (or bf16 if requested)
    acc = jnp.dot(p_ref[...], w_ref[...], preferred_element_type=jnp.float32)
    o_ref[...] = (acc + b_ref[...]).astype(o_ref.dtype)


def patch_proj(patches_2d, w_flat, bias, *, out_dtype=jnp.float32):
    """tokens[m, :] = patches_2d[m, :] @ w_flat + bias  (the Conv2d hot path).

    patches_2d: [M, K]      bf16  (M = B*N, K = C*P*P; K may be < 128)
    w_flat:     [K, D_pad]  bf16  (D_pad multiple of 128 -> lane-dense output)
    bias:       [1, D_pad]  f32
    returns:    [M, D_pad]  out_dtype
    """
    M, K = patches_2d.shape
    K_w, D_pad = w_flat.shape
    assert K == K_w and D_pad % 128 == 0

    # Fixed, MXU-aligned token tile (256/512 are multiples of 128 and 256, so one
    # choice serves v5e / v6e / v7x); pad M once, waste bounded by < TM rows total.
    TM = 256 if M <= 256 else 512
    M_pad = _round_up(M, TM)
    if M_pad != M:
        patches_2d = jnp.pad(patches_2d, ((0, M_pad - M), (0, 0)))

    # Only tile the embed dim when the (double-buffered) weight block is large;
    # keeps the weight + patch + output blocks comfortably inside v7x VMEM.
    TD = D_pad
    while (K * TD * 2 * 2) > (8 << 20) and TD % 256 == 0:
        TD //= 2

    grid = (D_pad // TD, M_pad // TM)   # D outer -> weight block constant over M loop

    bytes_accessed = (M_pad * K * patches_2d.dtype.itemsize
                      + K * D_pad * w_flat.dtype.itemsize
                      + D_pad * bias.dtype.itemsize
                      + M_pad * D_pad * jnp.dtype(out_dtype).itemsize)

    out = pl.pallas_call(
        _patch_proj_kernel,
        out_shape=jax.ShapeDtypeStruct((M_pad, D_pad), out_dtype),
        grid_spec=pltpu.PrefetchScalarGridSpec(
            num_scalar_prefetch=0,
            grid=grid,
            in_specs=[
                pl.BlockSpec((TM, K), lambda d, m: (m, 0)),
                pl.BlockSpec((K, TD), lambda d, m: (0, d)),
                pl.BlockSpec((1, TD), lambda d, m: (0, d)),
            ],
            out_specs=pl.BlockSpec((TM, TD), lambda d, m: (m, d)),
        ),
        compiler_params=pltpu.CompilerParams(
            dimension_semantics=("parallel", "parallel"),
            vmem_limit_bytes=_vmem_limit_bytes(),
        ),
        cost_estimate=pl.CostEstimate(
            flops=2 * M_pad * K * D_pad,
            transcendentals=0,
            bytes_accessed=bytes_accessed,
        ),
    )(patches_2d, w_flat, bias)
    return out[:M] if M_pad != M else out


# ------------------------------- JAX glue --------------------------------

def gather_patches(x, ys, xs, patch_size):
    """Patch extraction matching the torch.gather path: returns [B, N, C*P*P] in
    per-patch element order (c, dy, dx) — same as the Conv2d weight flatten.

    Uses a single vmapped lax.dynamic_slice gather of contiguous (C, P, P) windows
    (contiguous P-element runs per row) instead of element-wise flat takes, and
    inherits x's dtype (cast x to bf16 BEFORE calling to halve gather traffic).
    NOTE: out-of-range ys/xs are clamped (torch.gather would error)."""
    B, C, H, W = x.shape
    P = patch_size
    N = ys.shape[1]

    def window(img, y0, x0):
        return lax.dynamic_slice(img, (0, y0, x0), (C, P, P))

    per_image = jax.vmap(window, in_axes=(None, 0, 0))            # over N
    patches = jax.vmap(per_image, in_axes=(0, 0, 0))(x, ys, xs)   # [B, N, C, P, P]
    return patches.reshape(B, N, C * P * P)


def prepare_proj_params(conv_w, conv_b):
    """Precompute the flattened / D-padded / bf16 projection parameters once."""
    D, C, P, _ = conv_w.shape
    K = C * P * P
    D_pad = _round_up(D, 128)
    w_flat = conv_w.reshape(D, K).T                                # [K, D], (c,dy,dx) order
    w_flat = jnp.pad(w_flat, ((0, 0), (0, D_pad - D))).astype(jnp.bfloat16)
    bias = jnp.pad(conv_b.astype(jnp.float32), (0, D_pad - D)).reshape(1, D_pad)
    return w_flat, bias


@functools.partial(jax.jit, static_argnames=("patch_size", "embed_dim"))
def off_grid_patch_embed_gather_conv2d(x, ys, xs, w_flat_pad, bias_pad, *,
                                       patch_size, embed_dim):
    """Forward pass of OffGridPatchEmbedGatherConv2D.

    x:          [B, C, H, W]  f32 (NCHW, same as PyTorch)
    ys, xs:     [B, N]        int32 sampled top-left patch corners
    w_flat_pad: [K, D_pad]    bf16 flattened Conv2d weight (D padded to 128)
    bias_pad:   [1, D_pad]    f32  padded Conv2d bias
    returns (tokens [B, N, D] f32, patch_positions [B, N, 2])
    """
    B, C, H, W = x.shape
    N = ys.shape[1]
    D_pad = w_flat_pad.shape[1]

    x_bf = x.astype(jnp.bfloat16)                                  # cast once, before gather
    patches = gather_patches(x_bf, ys, xs, patch_size)             # [B, N, K] bf16
    K = patches.shape[-1]

    tokens2d = patch_proj(patches.reshape(B * N, K), w_flat_pad, bias_pad,
                          out_dtype=jnp.float32)                   # [B*N, D_pad]
    if D_pad != embed_dim:                                         # skip no-op lane slice
        tokens2d = tokens2d[:, :embed_dim]
    tokens = tokens2d.reshape(B, N, embed_dim)

    positions = jnp.stack([ys, xs], axis=-1)                       # [B, N, 2]
    return tokens, positions


# --------------------------------- main -----------------------------------

def _gather_patches_ref(x, ys, xs, patch_size):
    """Element-wise reference gather that mirrors the torch.gather index math."""
    B, C, H, W = x.shape
    P = patch_size
    N = ys.shape[1]
    base = (ys * W + xs).astype(jnp.int32)
    dy = jnp.arange(P, dtype=jnp.int32)[:, None]
    dx = jnp.arange(P, dtype=jnp.int32)[None, :]
    delta = (dy * W + dx).reshape(-1)
    idx = base[:, :, None] + delta[None, None, :]
    ch = jnp.arange(C, dtype=jnp.int32) * (H * W)
    idx = (idx[:, :, None, :] + ch[None, None, :, None]).reshape(B, N * C * P * P)
    img = x.reshape(B, C * H * W)
    g = jax.vmap(lambda im, ind: jnp.take(im, ind, axis=0))(img, idx)
    return g.reshape(B, N, C * P * P)


if __name__ == "__main__":
    key = jax.random.PRNGKey(0)
    k_x, k_w, k_b, k_y, k_xs = jax.random.split(key, 5)

    # Small shapes consistent with the module: img=16, patch=4, C=4, D=32, B=2.
    B, C, H, W = 2, 4, 16, 16
    P, D = 4, 32
    N = (H // P) * (W // P)                                        # 16 visible patches

    x = jax.random.normal(k_x, (B, C, H, W), dtype=jnp.float32)

    # Deterministic Conv2d parameter init (fan-in scaled), shapes per nn.Conv2d.
    fan_in = C * P * P
    conv_w = jax.random.normal(k_w, (D, C, P, P), dtype=jnp.float32) / jnp.sqrt(fan_in)
    conv_b = jax.random.normal(k_b, (D,), dtype=jnp.float32) * 0.01

    # Sampler (random_sampling): ys in [0, H-P), xs in [0, W-P).
    # TODO(synk): torch.randint RNG stream is not reproducible in JAX; uses jax.random.
    ys = jax.random.randint(k_y, (B, N), 0, H - P, dtype=jnp.int32)
    xs = jax.random.randint(k_xs, (B, N), 0, W - P, dtype=jnp.int32)

    w_flat_pad, bias_pad = prepare_proj_params(conv_w, conv_b)

    tokens, positions = off_grid_patch_embed_gather_conv2d(
        x, ys, xs, w_flat_pad, bias_pad, patch_size=P, embed_dim=D)
    jax.block_until_ready((tokens, positions))

    # Correctness checks.
    assert tokens.shape == (B, N, D)
    assert positions.shape == (B, N, 2)

    patches_ref = _gather_patches_ref(x, ys, xs, P)                # f32, torch-order

    # (a) Tight check against a reference using the same bf16 operands / f32 accumulate.
    tok_bf_ref = (jnp.einsum("bnk,kd->bnd",
                             patches_ref.astype(jnp.bfloat16).astype(jnp.float32),
                             w_flat_pad.astype(jnp.float32)) + bias_pad[0])[..., :D]
    assert jnp.allclose(tokens, tok_bf_ref, atol=1e-3, rtol=1e-3)

    # (b) Loose check against the full-f32 math of the original module
    #     (gather + stride==kernel Conv2d == per-patch matmul); bf16 inputs loosen
    #     the tolerance.
    tok_f32_ref = jnp.einsum("bnk,dk->bnd", patches_ref, conv_w.reshape(D, -1)) + conv_b
    assert jnp.allclose(tokens, tok_f32_ref, atol=5e-2, rtol=5e-2)

    print("KERNEL_OK")
</pallas_src>

<mosaic_0001>
module attributes {stable_mosaic.version = 11 : i64} {
  func.func @_patch_proj_kernel(%arg0: i32, %arg1: i32, %arg2: memref<256x64xbf16, #tpu.memory_space<vmem>>, %arg3: memref<64x128xbf16, #tpu.memory_space<vmem>>, %arg4: memref<1x128xf32, #tpu.memory_space<vmem>>, %arg5: memref<256x128xf32, #tpu.memory_space<vmem>>) attributes {dimension_semantics = [#tpu.dimension_semantics<parallel>, #tpu.dimension_semantics<parallel>], iteration_bounds = array<i64: 1, 1>, scalar_prefetch = 0 : i64, scratch_operands = 0 : i64, tpu.core_type = #tpu.core_type<tc>, window_params = [{transform_indices = @transform_0, window_bounds = array<i64: 256, 64>}, {transform_indices = @transform_1, window_bounds = array<i64: 64, 128>}, {transform_indices = @transform_2, window_bounds = array<i64: 1, 128>}, {transform_indices = @transform_3, window_bounds = array<i64: 256, 128>}]} {
    %c0 = arith.constant 0 : index
    %c0_0 = arith.constant 0 : index
    %0 = vector.load %arg2[%c0, %c0_0] : memref<256x64xbf16, #tpu.memory_space<vmem>>, vector<256x64xbf16>
    %c0_1 = arith.constant 0 : index
    %c0_2 = arith.constant 0 : index
    %1 = vector.load %arg3[%c0_1, %c0_2] : memref<64x128xbf16, #tpu.memory_space<vmem>>, vector<64x128xbf16>
    %cst = arith.constant dense<0.000000e+00> : vector<256x128xf32>
    %2 = tpu.matmul %0, %1, %cst {dimension_numbers = #tpu.dot_dimension_numbers<[1], [0], [0], [1], [0, 0, 1, 1], [], []>} : vector<256x64xbf16>, vector<64x128xbf16>, vector<256x128xf32> -> vector<256x128xf32>
    %c0_3 = arith.constant 0 : index
    %c0_4 = arith.constant 0 : index
    %3 = vector.load %arg4[%c0_3, %c0_4] : memref<1x128xf32, #tpu.memory_space<vmem>>, vector<1x128xf32>
    %4 = vector.broadcast %3 : vector<1x128xf32> to vector<256x128xf32>
    %5 = arith.addf %2, %4 : vector<256x128xf32>
    %c0_5 = arith.constant 0 : index
    %c0_6 = arith.constant 0 : index
    %6 = vector.load %arg5[%c0_5, %c0_6] : memref<256x128xf32, #tpu.memory_space<vmem>>, vector<256x128xf32>
    tpu.vector_store %arg5[%c0_5, %c0_6], %5 {strides = array<i32>} : memref<256x128xf32, #tpu.memory_space<vmem>>, vector<256x128xf32>,
    return
  }
  func.func @transform_0(%arg0: i32, %arg1: i32) -> (i32, i32) {
    %c0_i32 = arith.constant 0 : i32
    %c0_i32_0 = arith.constant 0 : i32
    return %arg1, %c0_i32 : i32, i32
  }
  func.func @transform_1(%arg0: i32, %arg1: i32) -> (i32, i32) {
    %c0_i32 = arith.constant 0 : i32
    %c0_i32_0 = arith.constant 0 : i32
    return %c0_i32, %arg0 : i32, i32
  }
  func.func @transform_2(%arg0: i32, %arg1: i32) -> (i32, i32) {
    %c0_i32 = arith.constant 0 : i32
    %c0_i32_0 = arith.constant 0 : i32
    return %c0_i32, %arg0 : i32, i32
  }
  func.func @transform_3(%arg0: i32, %arg1: i32) -> (i32, i32) {
    %c0_i32 = arith.constant 0 : i32
    return %arg1, %arg0 : i32, i32
  }
}

</mosaic_0001>

<llo_original>
// kernel: off_grid_patch_embed_gather_conv2d.1
$region0: #{off_grid_patch_embed_gather_conv2d.1}
  #allocation0 [shape = 'u32[]', space=smem, size = 0x4, offset = 0x4, fixed_abs, tag = 'smem constant byte address 0x4 - core index']
  #allocation1 [shape = 'u32[144,128]{1,0:T(1,128)}', space=vmem, size = 0x12000, scoped, tag = 'internal scratch']
  %s0 = inlined_call_operand.vmem [shape: bf16[256,64], index: 0, kind: input, shape index: {}]
  %s1 = inlined_call_operand.vmem [shape: bf16[64,128], index: 1, kind: input, shape index: {}]
  %s2 = inlined_call_operand.vmem [shape: f32[1,128], index: 2, kind: input, shape index: {}]
  %s3 = inlined_call_operand.vmem [shape: f32[256,128], index: 3, kind: output, shape index: {}]
  %s4 = sld [smem:[#allocation0]]
  $region22: #{off_grid_patch_embed_gather_conv2d.1} parent=0
    _
  %s6 = ssub.s32 1, %s4
  %s7 = scalar_select 0, %s6, %s4
  // Predicated region
  $region2: #{off_grid_patch_embed_gather_conv2d.1} parent=0 // pred_check
    _
  $region3: #{off_grid_patch_embed_gather_conv2d.1} parent=0 // pred_check_branch
    %9 = sbr.rel (0) target = $region5
  $region4: #{off_grid_patch_embed_gather_conv2d.1} parent=0 // pred_region
    _
  $region5: #{off_grid_patch_embed_gather_conv2d.1} parent=0 // pred_fallthru
    _
  // Predicated region
  $region6: #{off_grid_patch_embed_gather_conv2d.1} parent=0 // pred_check
    _
  $region7: #{off_grid_patch_embed_gather_conv2d.1} parent=0 // pred_check_branch
    %11 = sbr.rel (0) target = $region9
  $region8: #{off_grid_patch_embed_gather_conv2d.1} parent=0 // pred_region
    _
  $region9: #{off_grid_patch_embed_gather_conv2d.1} parent=0 // pred_fallthru
    _
  // Predicated region
  $region10: #{off_grid_patch_embed_gather_conv2d.1} parent=0 // pred_check
    _
  $region11: #{off_grid_patch_embed_gather_conv2d.1} parent=0 // pred_check_branch
    %13 = sbr.rel (0) target = $region13
  $region12: #{off_grid_patch_embed_gather_conv2d.1} parent=0 // pred_region
    _
  $region13: #{off_grid_patch_embed_gather_conv2d.1} parent=0 // pred_fallthru
    _
  %v15 = vld [vmem:[%s0] sm:$0xf]
  %v16 = vld [vmem:[%s0 + $0x4] sm:$0xf]
  %v17 = vld [vmem:[%s0 + $0x8] sm:$0xf]
  %v18 = vld [vmem:[%s0 + $0xc] sm:$0xf]
  %v19 = vld [vmem:[%s0 + $0x10] sm:$0xf]
  %v20 = vld [vmem:[%s0 + $0x14] sm:$0xf]
  %v21 = vld [vmem:[%s0 + $0x18] sm:$0xf]
  %v22 = vld [vmem:[%s0 + $0x1c] sm:$0xf]
  %v23 = vld [vmem:[%s0 + $0x20] sm:$0xf]
  %v24 = vld [vmem:[%s0 + $0x24] sm:$0xf]
  %v25 = vld [vmem:[%s0 + $0x28] sm:$0xf]
  %v26 = vld [vmem:[%s0 + $0x2c] sm:$0xf]
  %v27 = vld [vmem:[%s0 + $0x30] sm:$0xf]
  %v28 = vld [vmem:[%s0 + $0x34] sm:$0xf]
  %v29 = vld [vmem:[%s0 + $0x38] sm:$0xf]
  %v30 = vld [vmem:[%s0 + $0x3c] sm:$0xf]
  %v31 = vld [vmem:[%s0 + $0x40] sm:$0xf]
  %v32 = vld [vmem:[%s0 + $0x44] sm:$0xf]
  %v33 = vld [vmem:[%s0 + $0x48] sm:$0xf]
  %v34 = vld [vmem:[%s0 + $0x4c] sm:$0xf]
  %v35 = vld [vmem:[%s0 + $0x50] sm:$0xf]
  %v36 = vld [vmem:[%s0 + $0x54] sm:$0xf]
  %v37 = vld [vmem:[%s0 + $0x58] sm:$0xf]
  %v38 = vld [vmem:[%s0 + $0x5c] sm:$0xf]
  %v39 = vld [vmem:[%s0 + $0x60] sm:$0xf]
  %v40 = vld [vmem:[%s0 + $0x64] sm:$0xf]
  %v41 = vld [vmem:[%s0 + $0x68] sm:$0xf]
  %v42 = vld [vmem:[%s0 + $0x6c] sm:$0xf]
  %v43 = vld [vmem:[%s0 + $0x70] sm:$0xf]
  %v44 = vld [vmem:[%s0 + $0x74] sm:$0xf]
  %v45 = vld [vmem:[%s0 + $0x78] sm:$0xf]
  %v46 = vld [vmem:[%s0 + $0x7c] sm:$0xf]
  %v47 = vld [vmem:[%s1] sm:$0xf]
  %v48 = vld [vmem:[%s1 + $0x4] sm:$0xf]
  %v49 = vld [vmem:[%s1 + $0x8] sm:$0xf]
  %v50 = vld [vmem:[%s1 + $0xc] sm:$0xf]
  %v51 = vld [vmem:[%s1 + $0x10] sm:$0xf]
  %v52 = vld [vmem:[%s1 + $0x14] sm:$0xf]
  %v53 = vld [vmem:[%s1 + $0x18] sm:$0xf]
  %v54 = vld [vmem:[%s1 + $0x1c] sm:$0xf]
  %v55 = vld [vmem:[%s2] sm:$0x1]
  %v57 = vlaneseq
  %v58 = vshrl.u32 %v57, 7
  %v59 = vsub.s32 0, %v58
  %v60 = vrot.slane %v55, %v59
  %v94 = vunpack.c.l.b16 %v15
  %v95 = vunpack.c.l.b16 %v16
  %v96 = vunpack.c.l.b16 %v17
  %v97 = vunpack.c.l.b16 %v18
  %v98 = vunpack.c.l.b16 %v19
  %v99 = vunpack.c.l.b16 %v20
  %v100 = vunpack.c.l.b16 %v21
  %v101 = vunpack.c.l.b16 %v22
  %v102 = vunpack.c.l.b16 %v23
  %v103 = vunpack.c.l.b16 %v24
  %v104 = vunpack.c.l.b16 %v25
  %v105 = vunpack.c.l.b16 %v26
  %v106 = vunpack.c.l.b16 %v27
  %v107 = vunpack.c.l.b16 %v28
  %v108 = vunpack.c.l.b16 %v29
  %v109 = vunpack.c.l.b16 %v30
  %v110 = vunpack.c.l.b16 %v31
  %v111 = vunpack.c.l.b16 %v32
  %v112 = vunpack.c.l.b16 %v33
  %v113 = vunpack.c.l.b16 %v34
  %v114 = vunpack.c.l.b16 %v35
  %v115 = vunpack.c.l.b16 %v36
  %v116 = vunpack.c.l.b16 %v37
  %v117 = vunpack.c.l.b16 %v38
  %v118 = vunpack.c.l.b16 %v39
  %v119 = vunpack.c.l.b16 %v40
  %v120 = vunpack.c.l.b16 %v41
  %v121 = vunpack.c.l.b16 %v42
  %v122 = vunpack.c.l.b16 %v43
  %v123 = vunpack.c.l.b16 %v44
  %v124 = vunpack.c.l.b16 %v45
  %v125 = vunpack.c.l.b16 %v46
  %v126 = vpack.c.b16 %v95, %v94
  %v127 = vpack.c.b16 %v97, %v96
  %v128 = vpack.c.b16 %v99, %v98
  %v129 = vpack.c.b16 %v101, %v100
  %v130 = vpack.c.b16 %v103, %v102
  %v131 = vpack.c.b16 %v105, %v104
  %v132 = vpack.c.b16 %v107, %v106
  %v133 = vpack.c.b16 %v109, %v108
  %v134 = vpack.c.b16 %v111, %v110
  %v135 = vpack.c.b16 %v113, %v112
  %v136 = vpack.c.b16 %v115, %v114
  %v137 = vpack.c.b16 %v117, %v116
  %v138 = vpack.c.b16 %v119, %v118
  %v139 = vpack.c.b16 %v121, %v120
  %v140 = vpack.c.b16 %v123, %v122
  %v141 = vpack.c.b16 %v125, %v124
  %v150 = vunpack.c.l.b16 %v47
  %v151 = vunpack.c.l.b16 %v48
  %v152 = vunpack.c.l.b16 %v49
  %v153 = vunpack.c.l.b16 %v50
  %v154 = vunpack.c.l.b16 %v51
  %v155 = vunpack.c.l.b16 %v52
  %v156 = vunpack.c.l.b16 %v53
  %v157 = vunpack.c.l.b16 %v54
  %v158 = vpack.c.b16 %v151, %v150
  %v159 = vpack.c.b16 %v153, %v152
  %v160 = vpack.c.b16 %v155, %v154
  %v161 = vpack.c.b16 %v157, %v156
  %vm166 = vcmask 523264
  %v168 = vsel %vm166, %v126, 0
  %v171 = vsel %vm166, %v127, 0
  %v174 = vsel %vm166, %v128, 0
  %v177 = vsel %vm166, %v129, 0
  %v180 = vsel %vm166, %v130, 0
  %v183 = vsel %vm166, %v131, 0
  %v186 = vsel %vm166, %v132, 0
  %v189 = vsel %vm166, %v133, 0
  %v192 = vsel %vm166, %v134, 0
  %v195 = vsel %vm166, %v135, 0
  %v198 = vsel %vm166, %v136, 0
  %v201 = vsel %vm166, %v137, 0
  %v204 = vsel %vm166, %v138, 0
  %v207 = vsel %vm166, %v139, 0
  %v210 = vsel %vm166, %v140, 0
  %v213 = vsel %vm166, %v141, 0
  %215 = vmatprep.subr.bf16.mxu0 0
  %216 = vmatpush1.bf16.msra.mxu0 %v158
  %217 = vmatprep.subr.bf16.mxu0 0
  %218 = vmatpush1.bf16.msra.mxu0 %v159
  %219 = vmatprep.subr.bf16.mxu0 0
  %220 = vmatpush1.bf16.msra.mxu0 %v160
  %221 = vmatprep.subr.bf16.mxu0 0
  %222 = vmatpush1.bf16.msra.mxu0 %v161
  %223 = vmatprep.subr.bf16.mxu0 0
  %224 = vmatpush1.bf16.msra.mxu0 0
  %225 = vmatprep.subr.bf16.mxu0 0
  %226 = vmatpush1.bf16.msra.mxu0 0
  %227 = vmatprep.subr.bf16.mxu0 0
  %228 = vmatpush1.bf16.msra.mxu0 0
  %229 = vmatprep.subr.bf16.mxu0 0
  %230 = vmatpush1.bf16.msra.mxu0 0
  %231 = vmatprep.subr.bf16.mxu0 0
  %232 = vmatpush1.bf16.msra.mxu0 0
  %233 = vmatprep.subr.bf16.mxu0 0
  %234 = vmatpush1.bf16.msra.mxu0 0
  %235 = vmatprep.subr.bf16.mxu0 0
  %236 = vmatpush1.bf16.msra.mxu0 0
  %237 = vmatprep.subr.bf16.mxu0 0
  %238 = vmatpush1.bf16.msra.mxu0 0
  %239 = vmatprep.subr.bf16.mxu0 0
  %240 = vmatpush1.bf16.msra.mxu0 0
  %241 = vmatprep.subr.bf16.mxu0 0
  %242 = vmatpush1.bf16.msra.mxu0 0
  %243 = vmatprep.subr.bf16.mxu0 0
  %244 = vmatpush1.bf16.msra.mxu0 0
  %245 = vmatprep.subr.bf16.mxu0 0
  %246 = vmatpush1.bf16.msra.mxu0 0
  %247 = vmatprep.mubr.bf16.mxu0 0
  %248 = vmatmul.mubr.bf16.gmra.mrb[0].mxu0 %v168
  %v249 = vpop.f32.mrb[0].mxu0
  %v250 = vadd.f32 %v60, %v249
  %v251 = vpop.f32.mrb[0].mxu0
  %v252 = vpop.f32.mrb[0].mxu0
  %v253 = vadd.f32 %v60, %v252
  %v254 = vpop.f32.mrb[0].mxu0
  %255 = vmatprep.mubr.bf16.mxu0 0
  %256 = vmatmul.mubr.bf16.gmra.mrb[0].mxu0 %v171
  %v257 = vpop.f32.mrb[0].mxu0
  %v258 = vadd.f32 %v60, %v257
  %v259 = vpop.f32.mrb[0].mxu0
  %v260 = vpop.f32.mrb[0].mxu0
  %v261 = vadd.f32 %v60, %v260
  %v262 = vpop.f32.mrb[0].mxu0
  %263 = vmatprep.mubr.bf16.mxu0 0
  %264 = vmatmul.mubr.bf16.gmra.mrb[0].mxu0 %v174
  %v265 = vpop.f32.mrb[0].mxu0
  %v266 = vadd.f32 %v60, %v265
  %v267 = vpop.f32.mrb[0].mxu0
  %v268 = vpop.f32.mrb[0].mxu0
  %v269 = vadd.f32 %v60, %v268
  %v270 = vpop.f32.mrb[0].mxu0
  %271 = vmatprep.mubr.bf16.mxu0 0
  %272 = vmatmul.mubr.bf16.gmra.mrb[0].mxu0 %v177
  %v273 = vpop.f32.mrb[0].mxu0
  %v274 = vadd.f32 %v60, %v273
  %v275 = vpop.f32.mrb[0].mxu0
  %v276 = vpop.f32.mrb[0].mxu0
  %v277 = vadd.f32 %v60, %v276
  %v278 = vpop.f32.mrb[0].mxu0
  %279 = vmatprep.mubr.bf16.mxu0 0
  %280 = vmatmul.mubr.bf16.gmra.mrb[0].mxu0 %v180
  %v281 = vpop.f32.mrb[0].mxu0
  %v282 = vadd.f32 %v60, %v281
  %v283 = vpop.f32.mrb[0].mxu0
  %v284 = vpop.f32.mrb[0].mxu0
  %v285 = vadd.f32 %v60, %v284
  %v286 = vpop.f32.mrb[0].mxu0
  %287 = vmatprep.mubr.bf16.mxu0 0
  %288 = vmatmul.mubr.bf16.gmra.mrb[0].mxu0 %v183
  %v289 = vpop.f32.mrb[0].mxu0
  %v290 = vadd.f32 %v60, %v289
  %v291 = vpop.f32.mrb[0].mxu0
  %v292 = vpop.f32.mrb[0].mxu0
  %v293 = vadd.f32 %v60, %v292
  %v294 = vpop.f32.mrb[0].mxu0
  %295 = vmatprep.mubr.bf16.mxu0 0
  %296 = vmatmul.mubr.bf16.gmra.mrb[0].mxu0 %v186
  %v297 = vpop.f32.mrb[0].mxu0
  %v298 = vadd.f32 %v60, %v297
  %v299 = vpop.f32.mrb[0].mxu0
  %v300 = vpop.f32.mrb[0].mxu0
  %v301 = vadd.f32 %v60, %v300
  %v302 = vpop.f32.mrb[0].mxu0
  %303 = vmatprep.mubr.bf16.mxu0 0
  %304 = vmatmul.mubr.bf16.gmra.mrb[0].mxu0 %v189
  %v305 = vpop.f32.mrb[0].mxu0
  %v306 = vadd.f32 %v60, %v305
  %v307 = vpop.f32.mrb[0].mxu0
  %v308 = vpop.f32.mrb[0].mxu0
  %v309 = vadd.f32 %v60, %v308
  %v310 = vpop.f32.mrb[0].mxu0
  %311 = vmatprep.mubr.bf16.mxu0 0
  %312 = vmatmul.mubr.bf16.gmra.mrb[0].mxu0 %v192
  %v313 = vpop.f32.mrb[0].mxu0
  %v314 = vadd.f32 %v60, %v313
  %v315 = vpop.f32.mrb[0].mxu0
  %v316 = vpop.f32.mrb[0].mxu0
  %v317 = vadd.f32 %v60, %v316
  %v318 = vpop.f32.mrb[0].mxu0
  %319 = vmatprep.mubr.bf16.mxu0 0
  %320 = vmatmul.mubr.bf16.gmra.mrb[0].mxu0 %v195
  %v321 = vpop.f32.mrb[0].mxu0
  %v322 = vadd.f32 %v60, %v321
  %v323 = vpop.f32.mrb[0].mxu0
  %v324 = vpop.f32.mrb[0].mxu0
  %v325 = vadd.f32 %v60, %v324
  %v326 = vpop.f32.mrb[0].mxu0
  %327 = vmatprep.mubr.bf16.mxu0 0
  %328 = vmatmul.mubr.bf16.gmra.mrb[0].mxu0 %v198
  %v329 = vpop.f32.mrb[0].mxu0
  %v330 = vadd.f32 %v60, %v329
  %v331 = vpop.f32.mrb[0].mxu0
  %v332 = vpop.f32.mrb[0].mxu0
  %v333 = vadd.f32 %v60, %v332
  %v334 = vpop.f32.mrb[0].mxu0
  %335 = vmatprep.mubr.bf16.mxu0 0
  %336 = vmatmul.mubr.bf16.gmra.mrb[0].mxu0 %v201
  %v337 = vpop.f32.mrb[0].mxu0
  %v338 = vadd.f32 %v60, %v337
  %v339 = vpop.f32.mrb[0].mxu0
  %v340 = vpop.f32.mrb[0].mxu0
  %v341 = vadd.f32 %v60, %v340
  %v342 = vpop.f32.mrb[0].mxu0
  %343 = vmatprep.mubr.bf16.mxu0 0
  %344 = vmatmul.mubr.bf16.gmra.mrb[0].mxu0 %v204
  %v345 = vpop.f32.mrb[0].mxu0
  %v346 = vadd.f32 %v60, %v345
  %v347 = vpop.f32.mrb[0].mxu0
  %v348 = vpop.f32.mrb[0].mxu0
  %v349 = vadd.f32 %v60, %v348
  %v350 = vpop.f32.mrb[0].mxu0
  %351 = vmatprep.mubr.bf16.mxu0 0
  %352 = vmatmul.mubr.bf16.gmra.mrb[0].mxu0 %v207
  %v353 = vpop.f32.mrb[0].mxu0
  %v354 = vadd.f32 %v60, %v353
  %v355 = vpop.f32.mrb[0].mxu0
  %v356 = vpop.f32.mrb[0].mxu0
  %v357 = vadd.f32 %v60, %v356
  %v358 = vpop.f32.mrb[0].mxu0
  %359 = vmatprep.mubr.bf16.mxu0 0
  %360 = vmatmul.mubr.bf16.gmra.mrb[0].mxu0 %v210
  %v361 = vpop.f32.mrb[0].mxu0
  %v362 = vadd.f32 %v60, %v361
  %v363 = vpop.f32.mrb[0].mxu0
  %v364 = vpop.f32.mrb[0].mxu0
  %v365 = vadd.f32 %v60, %v364
  %v366 = vpop.f32.mrb[0].mxu0
  %367 = vmatprep.mubr.bf16.mxu0 0
  %368 = vmatmul.mubr.bf16.gmra.mrb[0].mxu0 %v213
  %v369 = vpop.f32.mrb[0].mxu0
  %v370 = vadd.f32 %v60, %v369
  %v371 = vpop.f32.mrb[0].mxu0
  %v372 = vpop.f32.mrb[0].mxu0
  %v373 = vadd.f32 %v60, %v372
  %v374 = vpop.f32.mrb[0].mxu0
  %375 = vdwg.mxu0
  %376 = vst [vmem:[%s3] sm:$0xff] %v250
  %377 = vst [vmem:[%s3 + $0x8] sm:$0xff] %v253
  %378 = vst [vmem:[%s3 + $0x10] sm:$0xff] %v258
  %379 = vst [vmem:[%s3 + $0x18] sm:$0xff] %v261
  %380 = vst [vmem:[%s3 + $0x20] sm:$0xff] %v266
  %381 = vst [vmem:[%s3 + $0x28] sm:$0xff] %v269
  %382 = vst [vmem:[%s3 + $0x30] sm:$0xff] %v274
  %383 = vst [vmem:[%s3 + $0x38] sm:$0xff] %v277
  %384 = vst [vmem:[%s3 + $0x40] sm:$0xff] %v282
  %385 = vst [vmem:[%s3 + $0x48] sm:$0xff] %v285
  %386 = vst [vmem:[%s3 + $0x50] sm:$0xff] %v290
  %387 = vst [vmem:[%s3 + $0x58] sm:$0xff] %v293
  %388 = vst [vmem:[%s3 + $0x60] sm:$0xff] %v298
  %389 = vst [vmem:[%s3 + $0x68] sm:$0xff] %v301
  %390 = vst [vmem:[%s3 + $0x70] sm:$0xff] %v306
  %391 = vst [vmem:[%s3 + $0x78] sm:$0xff] %v309
  %392 = vst [vmem:[%s3 + $0x80] sm:$0xff] %v314
  %393 = vst [vmem:[%s3 + $0x88] sm:$0xff] %v317
  %394 = vst [vmem:[%s3 + $0x90] sm:$0xff] %v322
  %395 = vst [vmem:[%s3 + $0x98] sm:$0xff] %v325
  %396 = vst [vmem:[%s3 + $0xa0] sm:$0xff] %v330
  %397 = vst [vmem:[%s3 + $0xa8] sm:$0xff] %v333
  %398 = vst [vmem:[%s3 + $0xb0] sm:$0xff] %v338
  %399 = vst [vmem:[%s3 + $0xb8] sm:$0xff] %v341
  %400 = vst [vmem:[%s3 + $0xc0] sm:$0xff] %v346
  %401 = vst [vmem:[%s3 + $0xc8] sm:$0xff] %v349
  %402 = vst [vmem:[%s3 + $0xd0] sm:$0xff] %v354
  %403 = vst [vmem:[%s3 + $0xd8] sm:$0xff] %v357
  %404 = vst [vmem:[%s3 + $0xe0] sm:$0xff] %v362
  %405 = vst [vmem:[%s3 + $0xe8] sm:$0xff] %v365
  %406 = vst [vmem:[%s3 + $0xf0] sm:$0xff] %v370
  %407 = vst [vmem:[%s3 + $0xf8] sm:$0xff] %v373
  // Predicated region
  $region14: #{off_grid_patch_embed_gather_conv2d.1} parent=0 // pred_check
    _
  $region15: #{off_grid_patch_embed_gather_conv2d.1} parent=0 // pred_check_branch
    %409 = sbr.rel (0) target = $region17
  $region16: #{off_grid_patch_embed_gather_conv2d.1} parent=0 // pred_region
    _
  $region17: #{off_grid_patch_embed_gather_conv2d.1} parent=0 // pred_fallthru
    _
  // Predicated region
  $region18: #{off_grid_patch_embed_gather_conv2d.1} parent=0 // pred_check
    _
  $region19: #{off_grid_patch_embed_gather_conv2d.1} parent=0 // pred_check_branch
    %411 = sbr.rel (0) target = $region21
  $region20: #{off_grid_patch_embed_gather_conv2d.1} parent=0 // pred_region
    _
  $region21: #{off_grid_patch_embed_gather_conv2d.1} parent=0 // pred_fallthru
    _

</llo_original>
